<compile_context>
chip_gen: v7x
topology: tpu7x:2x2x1
jax: 0.10.0
libtpu: 0.0.40
codegen_flags: <defaults>
</compile_context>

<pallas_src>
import functools

import jax
import jax.numpy as jnp
from jax.experimental import pallas as pl
from jax.experimental.pallas import tpu as pltpu


def _round_up(x, m):
    return ((x + m - 1) // m) * m


def _efs_energy_kernel(x_ref, batch_ref, w1_ref, b1_ref, w2_ref, b2_ref,
                       w3_ref, b3_ref, node_e_ref, part_ref):
    # x_ref: (TILE_N, C) f32 — the l=0 plane rows for this tile.
    x = x_ref[...]

    # ---- energy_block MLP: two lane-dense MXU matmuls + EUP sigmoid ----
    h1 = jnp.dot(x, w1_ref[...], preferred_element_type=jnp.float32) + b1_ref[...]
    h1 = h1 * jax.nn.sigmoid(h1)                       # SiLU (logistic -> EUP)
    h2 = jnp.dot(h1, w2_ref[...], preferred_element_type=jnp.float32) + b2_ref[...]
    h2 = h2 * jax.nn.sigmoid(h2)

    # ---- H -> 1 projection on VPU/XLU (avoid a 1-column MXU matmul) ----
    # w3_ref: (1, H) row, b3_ref: (1, 1) scalar.
    node_e = jnp.sum(h2 * w3_ref[...], axis=-1, keepdims=True) + b3_ref[...]
    node_e_ref[...] = node_e                           # (TILE_N, 1)

    # ---- per-tile, per-system partial energies (masked VPU sum) ----
    tile_n = node_e.shape[0]
    b_pad = part_ref.shape[-1]
    sys_iota = jax.lax.broadcasted_iota(jnp.int32, (tile_n, b_pad), 1)
    contrib = jnp.where(batch_ref[...] == sys_iota, node_e, 0.0)   # (TILE_N, B_pad)
    part = jnp.sum(contrib, axis=0, keepdims=True)                 # (1, B_pad)
    part_ref[...] = part.reshape(part_ref.shape)                   # (1, 1, B_pad)


@functools.partial(jax.jit, static_argnames=("num_systems", "tile_n"))
def mlp_efs_head_energy(node_embedding, batch, params, *, num_systems,
                        tile_n=1024):
    """Returns (energy (B,), node_energy (N,1,1)) matching the PyTorch module."""
    n, l, c = node_embedding.shape
    h = params["w1"].shape[1]

    tile_n = min(tile_n, _round_up(n, 8))
    n_pad = _round_up(n, tile_n)
    num_tiles = n_pad // tile_n
    b_pad = _round_up(max(num_systems, 1), 128)

    # Zero-copy path: view (N, L, C) as (N, L*C) (bitcast, no HBM traffic) and
    # let the BlockSpec DMA only the first C columns (== the l=0 plane).
    zero_copy = (n_pad == n) and (c % 128 == 0)
    if zero_copy:
        x_in = node_embedding.reshape(n, l * c)
    else:
        # Ragged / odd-channel fallback: materialize + pad the l=0 plane only.
        x_in = jnp.pad(node_embedding[:, 0, :], ((0, n_pad - n), (0, 0)))

    batch2d = batch.reshape(n, 1).astype(jnp.int32)
    if n_pad != n:
        # Sentinel id -1 never matches the system iota -> padded rows add 0.
        batch2d = jnp.pad(batch2d, ((0, n_pad - n), (0, 0)), constant_values=-1)

    w3_row = params["w3"].reshape(1, h)
    b3 = params["b3"].reshape(1, 1)

    node_e, parts = pl.pallas_call(
        _efs_energy_kernel,
        out_shape=(
            jax.ShapeDtypeStruct((n_pad, 1), jnp.float32),
            jax.ShapeDtypeStruct((num_tiles, 1, b_pad), jnp.float32),
        ),
        grid=(num_tiles,),
        in_specs=[
            pl.BlockSpec((tile_n, c), lambda i: (i, 0)),   # x (l=0 plane rows)
            pl.BlockSpec((tile_n, 1), lambda i: (i, 0)),   # batch ids
            pl.BlockSpec((c, h), lambda i: (0, 0)),        # W1 (resident)
            pl.BlockSpec((1, h), lambda i: (0, 0)),        # b1
            pl.BlockSpec((h, h), lambda i: (0, 0)),        # W2 (resident)
            pl.BlockSpec((1, h), lambda i: (0, 0)),        # b2
            pl.BlockSpec((1, h), lambda i: (0, 0)),        # W3 as a row
            pl.BlockSpec((1, 1), lambda i: (0, 0)),        # b3
        ],
        out_specs=(
            pl.BlockSpec((tile_n, 1), lambda i: (i, 0)),       # node energies
            pl.BlockSpec((1, 1, b_pad), lambda i: (i, 0, 0)),  # per-tile partials
        ),
        compiler_params=pltpu.CompilerParams(
            dimension_semantics=("parallel",)),
    )(x_in, batch2d, params["w1"], params["b1"], params["w2"], params["b2"],
      w3_row, b3)

    energy = parts.reshape(num_tiles, b_pad).sum(axis=0)[:num_systems]
    node_energy = node_e[:n].reshape(-1, 1, 1)          # .view(-1, 1, 1)
    return energy, node_energy


def init_params(key, sphere_channels, hidden_channels):
    """Deterministic Linear params (PyTorch-style uniform fan-in init)."""
    ks = jax.random.split(key, 6)

    def lin(kw, kb, fan_in, fan_out):
        bound = 1.0 / jnp.sqrt(fan_in)
        w = jax.random.uniform(kw, (fan_in, fan_out), jnp.float32, -bound, bound)
        b = jax.random.uniform(kb, (1, fan_out), jnp.float32, -bound, bound)
        return w, b

    w1, b1 = lin(ks[0], ks[1], sphere_channels, hidden_channels)
    w2, b2 = lin(ks[2], ks[3], hidden_channels, hidden_channels)
    w3, b3 = lin(ks[4], ks[5], hidden_channels, 1)
    return {"w1": w1, "b1": b1, "w2": w2, "b2": b2, "w3": w3, "b3": b3}


def _reference(node_embedding, batch, params, num_systems):
    x = node_embedding[:, 0, :]
    h1 = jax.nn.silu(x @ params["w1"] + params["b1"])
    h2 = jax.nn.silu(h1 @ params["w2"] + params["b2"])
    node_e = (h2 @ params["w3"] + params["b3"]).reshape(-1)
    energy = jnp.zeros((num_systems,), jnp.float32).at[batch].add(node_e)
    return energy, node_e.reshape(-1, 1, 1)


if __name__ == "__main__":
    key = jax.random.PRNGKey(0)
    k_emb, k_par = jax.random.split(key)

    # Small shapes consistent with the module: N atoms, L spherical coeffs,
    # sphere_channels=128, hidden_channels=128, 4 systems in the batch.
    N, L, C, H, B = 64, 9, 128, 128, 4

    node_embedding = jax.random.normal(k_emb, (N, L, C), jnp.float32)
    # data['batch']: system id per atom (sorted, like torch_geometric batching)
    batch = jnp.repeat(jnp.arange(B, dtype=jnp.int32), N // B)
    params = init_params(k_par, C, H)

    energy, node_energy = mlp_efs_head_energy(node_embedding, batch, params,
                                              num_systems=B)
    jax.block_until_ready((energy, node_energy))

    ref_energy, ref_node_energy = _reference(node_embedding, batch, params, B)
    assert energy.shape == (B,)
    assert node_energy.shape == (N, 1, 1)
    assert jnp.allclose(energy, ref_energy, atol=1e-4, rtol=1e-4)
    assert jnp.allclose(node_energy, ref_node_energy, atol=1e-4, rtol=1e-4)

    print("KERNEL_OK")
</pallas_src>

<mosaic_0001>
module attributes {stable_mosaic.version = 11 : i64} {
  func.func @_efs_energy_kernel(%arg0: i32, %arg1: memref<64x128xf32, #tpu.memory_space<vmem>>, %arg2: memref<64x1xi32, #tpu.memory_space<vmem>>, %arg3: memref<128x128xf32, #tpu.memory_space<vmem>>, %arg4: memref<1x128xf32, #tpu.memory_space<vmem>>, %arg5: memref<128x128xf32, #tpu.memory_space<vmem>>, %arg6: memref<1x128xf32, #tpu.memory_space<vmem>>, %arg7: memref<1x128xf32, #tpu.memory_space<vmem>>, %arg8: memref<1x1xf32, #tpu.memory_space<vmem>>, %arg9: memref<64x1xf32, #tpu.memory_space<vmem>>, %arg10: memref<1x1x128xf32, #tpu.memory_space<vmem>>) attributes {dimension_semantics = [#tpu.dimension_semantics<parallel>], iteration_bounds = array<i64: 1>, scalar_prefetch = 0 : i64, scratch_operands = 0 : i64, tpu.core_type = #tpu.core_type<tc>, window_params = [{transform_indices = @transform_0, window_bounds = array<i64: 64, 128>}, {transform_indices = @transform_1, window_bounds = array<i64: 64, 1>}, {pipeline_mode = #tpu.pipeline_mode<synchronous>, transform_indices = @transform_2, window_bounds = array<i64: 128, 128>}, {pipeline_mode = #tpu.pipeline_mode<synchronous>, transform_indices = @transform_3, window_bounds = array<i64: 1, 128>}, {pipeline_mode = #tpu.pipeline_mode<synchronous>, transform_indices = @transform_4, window_bounds = array<i64: 128, 128>}, {pipeline_mode = #tpu.pipeline_mode<synchronous>, transform_indices = @transform_5, window_bounds = array<i64: 1, 128>}, {pipeline_mode = #tpu.pipeline_mode<synchronous>, transform_indices = @transform_6, window_bounds = array<i64: 1, 128>}, {pipeline_mode = #tpu.pipeline_mode<synchronous>, transform_indices = @transform_7, window_bounds = array<i64: 1, 1>}, {transform_indices = @transform_8, window_bounds = array<i64: 64, 1>}, {transform_indices = @transform_9, window_bounds = array<i64: 1, 1, 128>}]} {
    %c0 = arith.constant 0 : index
    %c0_0 = arith.constant 0 : index
    %0 = vector.load %arg1[%c0, %c0_0] : memref<64x128xf32, #tpu.memory_space<vmem>>, vector<64x128xf32>
    %c0_1 = arith.constant 0 : index
    %c0_2 = arith.constant 0 : index
    %1 = vector.load %arg3[%c0_1, %c0_2] : memref<128x128xf32, #tpu.memory_space<vmem>>, vector<128x128xf32>
    %cst = arith.constant dense<0.000000e+00> : vector<64x128xf32>
    %2 = tpu.matmul %0, %1, %cst {dimension_numbers = #tpu.dot_dimension_numbers<[1], [0], [0], [1], [0, 0, 1, 1], [], []>} : vector<64x128xf32>, vector<128x128xf32>, vector<64x128xf32> -> vector<64x128xf32>
    %c0_3 = arith.constant 0 : index
    %c0_4 = arith.constant 0 : index
    %3 = vector.load %arg4[%c0_3, %c0_4] : memref<1x128xf32, #tpu.memory_space<vmem>>, vector<1x128xf32>
    %4 = vector.broadcast %3 : vector<1x128xf32> to vector<64x128xf32>
    %5 = arith.addf %2, %4 : vector<64x128xf32>
    %6 = arith.negf %5 : vector<64x128xf32>
    %7 = math.exp %6 : vector<64x128xf32>
    %cst_5 = arith.constant 1.000000e+00 : f32
    %8 = vector.broadcast %cst_5 : f32 to vector<64x128xf32>
    %9 = arith.addf %8, %7 : vector<64x128xf32>
    %10 = arith.divf %8, %9 : vector<64x128xf32>
    %11 = arith.mulf %5, %10 : vector<64x128xf32>
    %c0_6 = arith.constant 0 : index
    %c0_7 = arith.constant 0 : index
    %12 = vector.load %arg5[%c0_6, %c0_7] : memref<128x128xf32, #tpu.memory_space<vmem>>, vector<128x128xf32>
    %cst_8 = arith.constant dense<0.000000e+00> : vector<64x128xf32>
    %13 = tpu.matmul %11, %12, %cst_8 {dimension_numbers = #tpu.dot_dimension_numbers<[1], [0], [0], [1], [0, 0, 1, 1], [], []>} : vector<64x128xf32>, vector<128x128xf32>, vector<64x128xf32> -> vector<64x128xf32>
    %c0_9 = arith.constant 0 : index
    %c0_10 = arith.constant 0 : index
    %14 = vector.load %arg6[%c0_9, %c0_10] : memref<1x128xf32, #tpu.memory_space<vmem>>, vector<1x128xf32>
    %15 = vector.broadcast %14 : vector<1x128xf32> to vector<64x128xf32>
    %16 = arith.addf %13, %15 : vector<64x128xf32>
    %17 = arith.negf %16 : vector<64x128xf32>
    %18 = math.exp %17 : vector<64x128xf32>
    %cst_11 = arith.constant 1.000000e+00 : f32
    %19 = vector.broadcast %cst_11 : f32 to vector<64x128xf32>
    %20 = arith.addf %19, %18 : vector<64x128xf32>
    %21 = arith.divf %19, %20 : vector<64x128xf32>
    %22 = arith.mulf %16, %21 : vector<64x128xf32>
    %c0_12 = arith.constant 0 : index
    %c0_13 = arith.constant 0 : index
    %23 = vector.load %arg7[%c0_12, %c0_13] : memref<1x128xf32, #tpu.memory_space<vmem>>, vector<1x128xf32>
    %24 = vector.broadcast %23 : vector<1x128xf32> to vector<64x128xf32>
    %25 = arith.mulf %22, %24 : vector<64x128xf32>
    %cst_14 = arith.constant dense<0.000000e+00> : vector<64xf32>
    %26 = vector.multi_reduction <add>, %25, %cst_14 [1] : vector<64x128xf32> to vector<64xf32>
    %27 = vector.shape_cast %26 : vector<64xf32> to vector<64x1xf32>
    %c0_15 = arith.constant 0 : index
    %c0_16 = arith.constant 0 : index
    %28 = vector.load %arg8[%c0_15, %c0_16] : memref<1x1xf32, #tpu.memory_space<vmem>>, vector<1x1xf32>
    %29 = vector.broadcast %28 : vector<1x1xf32> to vector<64x1xf32>
    %30 = arith.addf %27, %29 : vector<64x1xf32>
    %c0_17 = arith.constant 0 : index
    %c0_18 = arith.constant 0 : index
    %31 = vector.load %arg9[%c0_17, %c0_18] : memref<64x1xf32, #tpu.memory_space<vmem>>, vector<64x1xf32>
    tpu.vector_store %arg9[%c0_17, %c0_18], %30 {strides = array<i32>} : memref<64x1xf32, #tpu.memory_space<vmem>>, vector<64x1xf32>,
    %32 = tpu.iota {dimensions = array<i32: 1>} : vector<64x128xi32>
    %c0_19 = arith.constant 0 : index
    %c0_20 = arith.constant 0 : index
    %33 = vector.load %arg2[%c0_19, %c0_20] : memref<64x1xi32, #tpu.memory_space<vmem>>, vector<64x1xi32>
    %34 = vector.broadcast %33 : vector<64x1xi32> to vector<64x128xi32>
    %35 = arith.cmpi eq, %34, %32 : vector<64x128xi32>
    %cst_21 = arith.constant 0.000000e+00 : f32
    %36 = vector.shape_cast %30 : vector<64x1xf32> to vector<64x1xf32>
    %37 = vector.broadcast %36 : vector<64x1xf32> to vector<64x128xf32>
    %38 = vector.broadcast %cst_21 : f32 to vector<64x128xf32>
    %39 = arith.select %35, %37, %38 : vector<64x128xi1>, vector<64x128xf32>
    %cst_22 = arith.constant dense<0.000000e+00> : vector<128xf32>
    %40 = vector.multi_reduction <add>, %39, %cst_22 [0] : vector<64x128xf32> to vector<128xf32>
    %41 = vector.shape_cast %40 : vector<128xf32> to vector<1x128xf32>
    %42 = vector.shape_cast %41 : vector<1x128xf32> to vector<1x1x128xf32>
    %c0_23 = arith.constant 0 : index
    %c0_24 = arith.constant 0 : index
    %c0_25 = arith.constant 0 : index
    %43 = vector.load %arg10[%c0_23, %c0_24, %c0_25] : memref<1x1x128xf32, #tpu.memory_space<vmem>>, vector<1x1x128xf32>
    tpu.vector_store %arg10[%c0_23, %c0_24, %c0_25], %42 {strides = array<i32>} : memref<1x1x128xf32, #tpu.memory_space<vmem>>, vector<1x1x128xf32>,
    return
  }
  func.func @transform_0(%arg0: i32) -> (i32, i32) {
    %c0_i32 = arith.constant 0 : i32
    %c0_i32_0 = arith.constant 0 : i32
    return %arg0, %c0_i32 : i32, i32
  }
  func.func @transform_1(%arg0: i32) -> (i32, i32) {
    %c0_i32 = arith.constant 0 : i32
    %c0_i32_0 = arith.constant 0 : i32
    return %arg0, %c0_i32 : i32, i32
  }
  func.func @transform_2(%arg0: i32) -> (i32, i32) {
    %c0_i32 = arith.constant 0 : i32
    %c0_i32_0 = arith.constant 0 : i32
    %c0_i32_1 = arith.constant 0 : i32
    return %c0_i32, %c0_i32_0 : i32, i32
  }
  func.func @transform_3(%arg0: i32) -> (i32, i32) {
    %c0_i32 = arith.constant 0 : i32
    %c0_i32_0 = arith.constant 0 : i32
    %c0_i32_1 = arith.constant 0 : i32
    return %c0_i32, %c0_i32_0 : i32, i32
  }
  func.func @transform_4(%arg0: i32) -> (i32, i32) {
    %c0_i32 = arith.constant 0 : i32
    %c0_i32_0 = arith.constant 0 : i32
    %c0_i32_1 = arith.constant 0 : i32
    return %c0_i32, %c0_i32_0 : i32, i32
  }
  func.func @transform_5(%arg0: i32) -> (i32, i32) {
    %c0_i32 = arith.constant 0 : i32
    %c0_i32_0 = arith.constant 0 : i32
    %c0_i32_1 = arith.constant 0 : i32
    return %c0_i32, %c0_i32_0 : i32, i32
  }
  func.func @transform_6(%arg0: i32) -> (i32, i32) {
    %c0_i32 = arith.constant 0 : i32
    %c0_i32_0 = arith.constant 0 : i32
    %c0_i32_1 = arith.constant 0 : i32
    return %c0_i32, %c0_i32_0 : i32, i32
  }
  func.func @transform_7(%arg0: i32) -> (i32, i32) {
    %c0_i32 = arith.constant 0 : i32
    %c0_i32_0 = arith.constant 0 : i32
    %c0_i32_1 = arith.constant 0 : i32
    return %c0_i32, %c0_i32_0 : i32, i32
  }
  func.func @transform_8(%arg0: i32) -> (i32, i32) {
    %c0_i32 = arith.constant 0 : i32
    %c0_i32_0 = arith.constant 0 : i32
    return %arg0, %c0_i32 : i32, i32
  }
  func.func @transform_9(%arg0: i32) -> (i32, i32, i32) {
    %c0_i32 = arith.constant 0 : i32
    %c0_i32_0 = arith.constant 0 : i32
    %c0_i32_1 = arith.constant 0 : i32
    return %arg0, %c0_i32, %c0_i32_0 : i32, i32, i32
  }
}

</mosaic_0001>

<llo_original>
// kernel: mlp_efs_head_energy.1
$region0: #{mlp_efs_head_energy.1}
  #allocation0 [shape = 'u32[]', space=smem, size = 0x4, offset = 0x4, fixed_abs, tag = 'smem constant byte address 0x4 - core index']
  #allocation1 [shape = 'u32[144,128]{1,0:T(1,128)}', space=vmem, size = 0x12000, scoped, tag = 'internal scratch']
  #allocation2 [shape = 'f32[1,1]{1,0:T(1,128)S(1)}', space=vmem, size = 0x200, scoped, tag = 'scoped memory for mlp_efs_head_energy.1']
  %s0 = inlined_call_operand.vmem [shape: f32[64,1152], index: 0, kind: input, shape index: {}]
  %s1 = inlined_call_operand.vmem [shape: s32[64,1], index: 1, kind: input, shape index: {}]
  %s2 = inlined_call_operand.vmem [shape: f32[128,128], index: 2, kind: input, shape index: {}]
  %s3 = inlined_call_operand.vmem [shape: f32[1,128], index: 3, kind: input, shape index: {}]
  %s4 = inlined_call_operand.vmem [shape: f32[128,128], index: 4, kind: input, shape index: {}]
  %s5 = inlined_call_operand.vmem [shape: f32[1,128], index: 5, kind: input, shape index: {}]
  %s6 = inlined_call_operand.vmem [shape: f32[1,128], index: 6, kind: input, shape index: {}]
  %s7 = inlined_call_operand.<no memory space> [shape: f32[1,1], index: 7, kind: input, shape index: {}]
  %s8 = inlined_call_operand.vmem [shape: f32[64,1], index: 8, kind: output, shape index: {0}]
  %s9 = inlined_call_operand.vmem [shape: f32[1,1,128], index: 9, kind: output, shape index: {1}]
  %10 = xla_tuple %s8, %s9
  %s11 = sld [smem:[#allocation0]]
  $region88: #{mlp_efs_head_energy.1} parent=0
    _
  %s13 = ssub.s32 1, %s11
  %s14 = scalar_select 0, %s13, %s11
  %v15 = vstv %s7
  %16 = vst [vmem:[#allocation2] sm:$0x1] %v15
  $region1: #{mlp_efs_head_energy.1} parent=0
    #allocation3 [shape = 'u8[32768]{0}', space=vmem, size = 0x8000, scoped, tag = 'input window, operand 0, single buffered']
    // Predicated region
    $region2: #{mlp_efs_head_energy.1} parent=1 // pred_check
      _
    $region3: #{mlp_efs_head_energy.1} parent=1 // pred_check_branch
      %18 = sbr.rel (0) target = $region5
    $region4: #{mlp_efs_head_energy.1} parent=1 // pred_region
      // Predicated region
      $region6: #{mlp_efs_head_energy.1} parent=4 // pred_check
        _
      $region7: #{mlp_efs_head_energy.1} parent=4 // pred_check_branch
        %20 = sbr.rel (0) target = $region9
      $region8: #{mlp_efs_head_energy.1} parent=4 // pred_region
        // Predicated region
        $region10: #{mlp_efs_head_energy.1} parent=8 // pred_check
          _
        $region11: #{mlp_efs_head_energy.1} parent=8 // pred_check_branch
          %22 = sbr.rel (0) target = $region13
        $region12: #{mlp_efs_head_energy.1} parent=8 // pred_region
          // Predicated region
          $region25: #{mlp_efs_head_energy.1} parent=12 // pred_check
            _
          $region26: #{mlp_efs_head_energy.1} parent=12 // pred_check_branch
            %51 = sbr.rel (0) target = $region28
          $region27: #{mlp_efs_head_energy.1} parent=12 // pred_region
            loop: start=0, step=1, limit=1
            $region29: #{mlp_efs_head_energy.1} parent=27 // loop_pre_header
              _
            $region30: #{mlp_efs_head_energy.1} parent=27 // loop_header
              %s53 = sphi 0, %s57
              %p54 = scmp.ge.s32.totalorder %s53, 1
              %s58 = sphi %s0, %s0
              %s59 = sphi [#allocation3], [#allocation3]
            $region31: #{mlp_efs_head_energy.1} parent=27 // loop_header_branch
              %56 = sbr.rel (%p54) target = $region35
            $region32: #{mlp_efs_head_energy.1} parent=27 // loop_body
              %v60 = vld [vmem:[%s58] sm:$0xff]
              %61 = vst [vmem:[%s59] sm:$0xff] %v60
              %v62 = vld [vmem:[%s58 + $0x48] sm:$0xff]
              %63 = vst [vmem:[%s59 + $0x8] sm:$0xff] %v62
              %v64 = vld [vmem:[%s58 + $0x90] sm:$0xff]
              %65 = vst [vmem:[%s59 + $0x10] sm:$0xff] %v64
              %v66 = vld [vmem:[%s58 + $0xd8] sm:$0xff]
              %67 = vst [vmem:[%s59 + $0x18] sm:$0xff] %v66
              %v68 = vld [vmem:[%s58 + $0x120] sm:$0xff]
              %69 = vst [vmem:[%s59 + $0x20] sm:$0xff] %v68
              %v70 = vld [vmem:[%s58 + $0x168] sm:$0xff]
              %71 = vst [vmem:[%s59 + $0x28] sm:$0xff] %v70
              %v72 = vld [vmem:[%s58 + $0x1b0] sm:$0xff]
              %73 = vst [vmem:[%s59 + $0x30] sm:$0xff] %v72
              %v74 = vld [vmem:[%s58 + $0x1f8] sm:$0xff]
              %75 = vst [vmem:[%s59 + $0x38] sm:$0xff] %v74
            $region33: #{mlp_efs_head_energy.1} parent=27 // loop_footer
              %s57 = sadd.s32 1, %s53
            $region34: #{mlp_efs_head_energy.1} parent=27 // loop_footer_branch
              %52 = sbr.rel target = $region30
            $region35: #{mlp_efs_head_energy.1} parent=27 // loop_exit
              _
          $region28: #{mlp_efs_head_energy.1} parent=12 // pred_fallthru
            _
          // Predicated region
          $region36: #{mlp_efs_head_energy.1} parent=12 // pred_check
            _
          $region37: #{mlp_efs_head_energy.1} parent=12 // pred_check_branch
            %77 = sbr.rel target = $region39
          $region38: #{mlp_efs_head_energy.1} parent=12 // pred_region
            _
          $region39: #{mlp_efs_head_energy.1} parent=12 // pred_fallthru
            _
        $region13: #{mlp_efs_head_energy.1} parent=8 // pred_fallthru
          _
        // Predicated region
        $region14: #{mlp_efs_head_energy.1} parent=8 // pred_check
          _
        $region15: #{mlp_efs_head_energy.1} parent=8 // pred_check_branch
          %24 = sbr.rel target = $region17
        $region16: #{mlp_efs_head_energy.1} parent=8 // pred_region
          loop: start=0, step=1, limit=1
          $region18: #{mlp_efs_head_energy.1} parent=16 // loop_pre_header
            _
          $region19: #{mlp_efs_head_energy.1} parent=16 // loop_header
            %s27 = sphi 0, %s31
            %p28 = scmp.ge.s32.totalorder %s27, 1
            %s32 = sphi %s0, %s0
            %s33 = sphi [#allocation3], [#allocation3]
          $region20: #{mlp_efs_head_energy.1} parent=16 // loop_header_branch
            %30 = sbr.rel (%p28) target = $region24
          $region21: #{mlp_efs_head_energy.1} parent=16 // loop_body
            %v34 = vld [vmem:[%s32] sm:$0xff]
            %35 = vst [vmem:[%s33] sm:$0xff] %v34
            %v36 = vld [vmem:[%s32 + $0x48] sm:$0xff]
            %37 = vst [vmem:[%s33 + $0x8] sm:$0xff] %v36
            %v38 = vld [vmem:[%s32 + $0x90] sm:$0xff]
            %39 = vst [vmem:[%s33 + $0x10] sm:$0xff] %v38
            %v40 = vld [vmem:[%s32 + $0xd8] sm:$0xff]
            %41 = vst [vmem:[%s33 + $0x18] sm:$0xff] %v40
            %v42 = vld [vmem:[%s32 + $0x120] sm:$0xff]
            %43 = vst [vmem:[%s33 + $0x20] sm:$0xff] %v42
            %v44 = vld [vmem:[%s32 + $0x168] sm:$0xff]
            %45 = vst [vmem:[%s33 + $0x28] sm:$0xff] %v44
            %v46 = vld [vmem:[%s32 + $0x1b0] sm:$0xff]
            %47 = vst [vmem:[%s33 + $0x30] sm:$0xff] %v46
            %v48 = vld [vmem:[%s32 + $0x1f8] sm:$0xff]
            %49 = vst [vmem:[%s33 + $0x38] sm:$0xff] %v48
          $region22: #{mlp_efs_head_energy.1} parent=16 // loop_footer
            %s31 = sadd.s32 1, %s27
          $region23: #{mlp_efs_head_energy.1} parent=16 // loop_footer_branch
            %26 = sbr.rel target = $region19
          $region24: #{mlp_efs_head_energy.1} parent=16 // loop_exit
            _
        $region17: #{mlp_efs_head_energy.1} parent=8 // pred_fallthru
          _
      $region9: #{mlp_efs_head_energy.1} parent=4 // pred_fallthru
        _
      %78 = vnop
    $region5: #{mlp_efs_head_energy.1} parent=1 // pred_fallthru
      _
    // Predicated region
    $region40: #{mlp_efs_head_energy.1} parent=1 // pred_check
      _
    $region41: #{mlp_efs_head_energy.1} parent=1 // pred_check_branch
      %80 = sbr.rel (0) target = $region43
    $region42: #{mlp_efs_head_energy.1} parent=1 // pred_region
      _
    $region43: #{mlp_efs_head_energy.1} parent=1 // pred_fallthru
      _
    // Predicated region
    $region44: #{mlp_efs_head_energy.1} parent=1 // pred_check
      _
    $region45: #{mlp_efs_head_energy.1} parent=1 // pred_check_branch
      %82 = sbr.rel (0) target = $region47
    $region46: #{mlp_efs_head_energy.1} parent=1 // pred_region
      _
    $region47: #{mlp_efs_head_energy.1} parent=1 // pred_fallthru
      _
    // Predicated region
    $region48: #{mlp_efs_head_energy.1} parent=1 // pred_check
      _
    $region49: #{mlp_efs_head_energy.1} parent=1 // pred_check_branch
      %84 = sbr.rel (0) target = $region51
    $region50: #{mlp_efs_head_energy.1} parent=1 // pred_region
      _
    $region51: #{mlp_efs_head_energy.1} parent=1 // pred_fallthru
      _
    // Predicated region
    $region52: #{mlp_efs_head_energy.1} parent=1 // pred_check
      _
    $region53: #{mlp_efs_head_energy.1} parent=1 // pred_check_branch
      %86 = sbr.rel (0) target = $region55
    $region54: #{mlp_efs_head_energy.1} parent=1 // pred_region
      _
    $region55: #{mlp_efs_head_energy.1} parent=1 // pred_fallthru
      _
    // Predicated region
    $region56: #{mlp_efs_head_energy.1} parent=1 // pred_check
      _
    $region57: #{mlp_efs_head_energy.1} parent=1 // pred_check_branch
      %88 = sbr.rel (0) target = $region59
    $region58: #{mlp_efs_head_energy.1} parent=1 // pred_region
      _
    $region59: #{mlp_efs_head_energy.1} parent=1 // pred_fallthru
      _
    // Predicated region
    $region60: #{mlp_efs_head_energy.1} parent=1 // pred_check
      _
    $region61: #{mlp_efs_head_energy.1} parent=1 // pred_check_branch
      %90 = sbr.rel (0) target = $region63
    $region62: #{mlp_efs_head_energy.1} parent=1 // pred_region
      _
    $region63: #{mlp_efs_head_energy.1} parent=1 // pred_fallthru
      _
    // Predicated region
    $region64: #{mlp_efs_head_energy.1} parent=1 // pred_check
      _
    $region65: #{mlp_efs_head_energy.1} parent=1 // pred_check_branch
      %92 = sbr.rel (0) target = $region67
    $region66: #{mlp_efs_head_energy.1} parent=1 // pred_region
      _
    $region67: #{mlp_efs_head_energy.1} parent=1 // pred_fallthru
      _
    // Predicated region
    $region68: #{mlp_efs_head_energy.1} parent=1 // pred_check
      _
    $region69: #{mlp_efs_head_energy.1} parent=1 // pred_check_branch
      %94 = sbr.rel (0) target = $region71
    $region70: #{mlp_efs_head_energy.1} parent=1 // pred_region
      _
    $region71: #{mlp_efs_head_energy.1} parent=1 // pred_fallthru
      _
    %v95 = vld [vmem:[#allocation3] sm:$0xff]
    %v96 = vld [vmem:[#allocation3 + $0x8] sm:$0xff]
    %v97 = vld [vmem:[#allocation3 + $0x10] sm:$0xff]
    %v98 = vld [vmem:[#allocation3 + $0x18] sm:$0xff]
    %v99 = vld [vmem:[#allocation3 + $0x20] sm:$0xff]
    %v100 = vld [vmem:[#allocation3 + $0x28] sm:$0xff]
    %v101 = vld [vmem:[#allocation3 + $0x30] sm:$0xff]
    %v102 = vld [vmem:[#allocation3 + $0x38] sm:$0xff]
    %v103 = vld [vmem:[%s2] sm:$0xff]
    %v104 = vld [vmem:[%s2 + $0x8] sm:$0xff]
    %v105 = vld [vmem:[%s2 + $0x10] sm:$0xff]
    %v106 = vld [vmem:[%s2 + $0x18] sm:$0xff]
    %v107 = vld [vmem:[%s2 + $0x20] sm:$0xff]
    %v108 = vld [vmem:[%s2 + $0x28] sm:$0xff]
    %v109 = vld [vmem:[%s2 + $0x30] sm:$0xff]
    %v110 = vld [vmem:[%s2 + $0x38] sm:$0xff]
    %v111 = vld [vmem:[%s2 + $0x40] sm:$0xff]
    %v112 = vld [vmem:[%s2 + $0x48] sm:$0xff]
    %v113 = vld [vmem:[%s2 + $0x50] sm:$0xff]
    %v114 = vld [vmem:[%s2 + $0x58] sm:$0xff]
    %v115 = vld [vmem:[%s2 + $0x60] sm:$0xff]
    %v116 = vld [vmem:[%s2 + $0x68] sm:$0xff]
    %v117 = vld [vmem:[%s2 + $0x70] sm:$0xff]
    %v118 = vld [vmem:[%s2 + $0x78] sm:$0xff]
    %v119 = vld [vmem:[%s3] sm:$0x1]
    %v121 = vlaneseq
    %v122 = vshrl.u32 %v121, 7
    %v123 = vsub.s32 0, %v122
    %v124 = vrot.slane %v119, %v123
    %126 = vmatprep.subr.mxu0 0.0
    %127 = vmatpush1.msra.mxu0 %v103
    %128 = vmatprep.subr.mxu0 0.0
    %129 = vmatpush1.msra.mxu0 %v104
    %130 = vmatprep.subr.mxu0 0.0
    %131 = vmatpush1.msra.mxu0 %v105
    %132 = vmatprep.subr.mxu0 0.0
    %133 = vmatpush1.msra.mxu0 %v106
    %134 = vmatprep.subr.mxu0 0.0
    %135 = vmatpush1.msra.mxu0 %v107
    %136 = vmatprep.subr.mxu0 0.0
    %137 = vmatpush1.msra.mxu0 %v108
    %138 = vmatprep.subr.mxu0 0.0
    %139 = vmatpush1.msra.mxu0 %v109
    %140 = vmatprep.subr.mxu0 0.0
    %141 = vmatpush1.msra.mxu0 %v110
    %142 = vmatprep.subr.mxu0 0.0
    %143 = vmatpush1.msra.mxu0 %v111
    %144 = vmatprep.subr.mxu0 0.0
    %145 = vmatpush1.msra.mxu0 %v112
    %146 = vmatprep.subr.mxu0 0.0
    %147 = vmatpush1.msra.mxu0 %v113
    %148 = vmatprep.subr.mxu0 0.0
    %149 = vmatpush1.msra.mxu0 %v114
    %150 = vmatprep.subr.mxu0 0.0
    %151 = vmatpush1.msra.mxu0 %v115
    %152 = vmatprep.subr.mxu0 0.0
    %153 = vmatpush1.msra.mxu0 %v116
    %154 = vmatprep.subr.mxu0 0.0
    %155 = vmatpush1.msra.mxu0 %v117
    %156 = vmatprep.subr.mxu0 0.0
    %157 = vmatpush1.msra.mxu0 %v118
    %158 = vmatprep.subr.mxu0 0.0
    %159 = vmatpush1.msra.mxu0 0.0
    %160 = vmatprep.subr.mxu0 0.0
    %161 = vmatpush1.msra.mxu0 0.0
    %162 = vmatprep.subr.mxu0 0.0
    %163 = vmatpush1.msra.mxu0 0.0
    %164 = vmatprep.subr.mxu0 0.0
    %165 = vmatpush1.msra.mxu0 0.0
    %166 = vmatprep.subr.mxu0 0.0
    %167 = vmatpush1.msra.mxu0 0.0
    %168 = vmatprep.subr.mxu0 0.0
    %169 = vmatpush1.msra.mxu0 0.0
    %170 = vmatprep.subr.mxu0 0.0
    %171 = vmatpush1.msra.mxu0 0.0
    %172 = vmatprep.subr.mxu0 0.0
    %173 = vmatpush1.msra.mxu0 0.0
    %174 = vmatprep.subr.mxu0 0.0
    %175 = vmatpush1.msra.mxu0 0.0
    %176 = vmatprep.subr.mxu0 0.0
    %177 = vmatpush1.msra.mxu0 0.0
    %178 = vmatprep.subr.mxu0 0.0
    %179 = vmatpush1.msra.mxu0 0.0
    %180 = vmatprep.subr.mxu0 0.0
    %181 = vmatpush1.msra.mxu0 0.0
    %182 = vmatprep.subr.mxu0 0.0
    %183 = vmatpush1.msra.mxu0 0.0
    %184 = vmatprep.subr.mxu0 0.0
    %185 = vmatpush1.msra.mxu0 0.0
    %186 = vmatprep.subr.mxu0 0.0
    %187 = vmatpush1.msra.mxu0 0.0
    %188 = vmatprep.subr.mxu0 0.0
    %189 = vmatpush1.msra.mxu0 0.0
    %190 = vmatprep.mubr.f32.mxu0 0.0
    %191 = vmatmul.mubr.f32.gmra.mrb[0].mxu0 %v95
    %v192 = vpop.f32.mrb[0].mxu0
    %v193 = vadd.f32 %v124, %v192
    %v194 = vpop.f32.mrb[0].mxu0
    %195 = vmatprep.mubr.f32.mxu0 0.0
    %196 = vmatmul.mubr.f32.gmra.mrb[0].mxu0 %v96
    %v197 = vpop.f32.mrb[0].mxu0
    %v198 = vadd.f32 %v124, %v197
    %v199 = vpop.f32.mrb[0].mxu0
    %200 = vmatprep.mubr.f32.mxu0 0.0
    %201 = vmatmul.mubr.f32.gmra.mrb[0].mxu0 %v97
    %v202 = vpop.f32.mrb[0].mxu0
    %v203 = vadd.f32 %v124, %v202
    %v204 = vpop.f32.mrb[0].mxu0
    %205 = vmatprep.mubr.f32.mxu0 0.0
    %206 = vmatmul.mubr.f32.gmra.mrb[0].mxu0 %v98
    %v207 = vpop.f32.mrb[0].mxu0
    %v208 = vadd.f32 %v124, %v207
    %v209 = vpop.f32.mrb[0].mxu0
    %210 = vmatprep.mubr.f32.mxu0 0.0
    %211 = vmatmul.mubr.f32.gmra.mrb[0].mxu0 %v99
    %v212 = vpop.f32.mrb[0].mxu0
    %v213 = vadd.f32 %v124, %v212
    %v214 = vpop.f32.mrb[0].mxu0
    %215 = vmatprep.mubr.f32.mxu0 0.0
    %216 = vmatmul.mubr.f32.gmra.mrb[0].mxu0 %v100
    %v217 = vpop.f32.mrb[0].mxu0
    %v218 = vadd.f32 %v124, %v217
    %v219 = vpop.f32.mrb[0].mxu0
    %220 = vmatprep.mubr.f32.mxu0 0.0
    %221 = vmatmul.mubr.f32.gmra.mrb[0].mxu0 %v101
    %v222 = vpop.f32.mrb[0].mxu0
    %v223 = vadd.f32 %v124, %v222
    %v224 = vpop.f32.mrb[0].mxu0
    %225 = vmatprep.mubr.f32.mxu0 0.0
    %226 = vmatmul.mubr.f32.gmra.mrb[0].mxu0 %v102
    %v227 = vpop.f32.mrb[0].mxu0
    %v228 = vadd.f32 %v124, %v227
    %v229 = vpop.f32.mrb[0].mxu0
    %230 = vdwg.mxu0
    %v231 = vxor.u32 %v193, 2147483648
    %v232 = vxor.u32 %v198, 2147483648
    %v233 = vxor.u32 %v203, 2147483648
    %v234 = vxor.u32 %v208, 2147483648
    %v235 = vxor.u32 %v213, 2147483648
    %v236 = vxor.u32 %v218, 2147483648
    %v237 = vxor.u32 %v223, 2147483648
    %v238 = vxor.u32 %v228, 2147483648
    %v239 = vmul.f32 %v231, 1.442695
    %v240 = vpow.pop %v239
    %v241 = vmul.f32 %v232, 1.442695
    %v242 = vpow.pop %v241
    %v243 = vmul.f32 %v233, 1.442695
    %v244 = vpow.pop %v243
    %v245 = vmul.f32 %v234, 1.442695
    %v246 = vpow.pop %v245
    %v247 = vmul.f32 %v235, 1.442695
    %v248 = vpow.pop %v247
    %v249 = vmul.f32 %v236, 1.442695
    %v250 = vpow.pop %v249
    %v251 = vmul.f32 %v237, 1.442695
    %v252 = vpow.pop %v251
    %v253 = vmul.f32 %v238, 1.442695
    %v254 = vpow.pop %v253
    %v255 = vadd.f32 %v240, 1.0
    %v256 = vadd.f32 %v242, 1.0
    %v257 = vadd.f32 %v244, 1.0
    %v258 = vadd.f32 %v246, 1.0
    %v259 = vadd.f32 %v248, 1.0
    %v260 = vadd.f32 %v250, 1.0
    %v261 = vadd.f32 %v252, 1.0
    %v262 = vadd.f32 %v254, 1.0
    %v263 = vrcp.pop %v255
    %v264 = vmul.f32 1.0, %v263
    %v265 = vrcp.pop %v256
    %v266 = vmul.f32 1.0, %v265
    %v267 = vrcp.pop %v257
    %v268 = vmul.f32 1.0, %v267
    %v269 = vrcp.pop %v258
    %v270 = vmul.f32 1.0, %v269
    %v271 = vrcp.pop %v259
    %v272 = vmul.f32 1.0, %v271
    %v273 = vrcp.pop %v260
    %v274 = vmul.f32 1.0, %v273
    %v275 = vrcp.pop %v261
    %v276 = vmul.f32 1.0, %v275
    %v277 = vrcp.pop %v262
    %v278 = vmul.f32 1.0, %v277
    %v279 = vmul.f32 %v193, %v264
    %v280 = vmul.f32 %v198, %v266
    %v281 = vmul.f32 %v203, %v268
    %v282 = vmul.f32 %v208, %v270
    %v283 = vmul.f32 %v213, %v272
    %v284 = vmul.f32 %v218, %v274
    %v285 = vmul.f32 %v223, %v276
    %v286 = vmul.f32 %v228, %v278
    %v287 = vld [vmem:[%s4] sm:$0xff]
    %v288 = vld [vmem:[%s4 + $0x8] sm:$0xff]
    %v289 = vld [vmem:[%s4 + $0x10] sm:$0xff]
    %v290 = vld [vmem:[%s4 + $0x18] sm:$0xff]
    %v291 = vld [vmem:[%s4 + $0x20] sm:$0xff]
    %v292 = vld [vmem:[%s4 + $0x28] sm:$0xff]
    %v293 = vld [vmem:[%s4 + $0x30] sm:$0xff]
    %v294 = vld [vmem:[%s4 + $0x38] sm:$0xff]
    %v295 = vld [vmem:[%s4 + $0x40] sm:$0xff]
    %v296 = vld [vmem:[%s4 + $0x48] sm:$0xff]
    %v297 = vld [vmem:[%s4 + $0x50] sm:$0xff]
    %v298 = vld [vmem:[%s4 + $0x58] sm:$0xff]
    %v299 = vld [vmem:[%s4 + $0x60] sm:$0xff]
    %v300 = vld [vmem:[%s4 + $0x68] sm:$0xff]
    %v301 = vld [vmem:[%s4 + $0x70] sm:$0xff]
    %v302 = vld [vmem:[%s4 + $0x78] sm:$0xff]
    %v303 = vld [vmem:[%s5] sm:$0x1]
    %v305 = vlaneseq
    %v306 = vshrl.u32 %v305, 7
    %v307 = vsub.s32 0, %v306
    %v308 = vrot.slane %v303, %v307
    %310 = vmatprep.subr.mxu0 0.0
    %311 = vmatpush1.msra.mxu0 %v287
    %312 = vmatprep.subr.mxu0 0.0
    %313 = vmatpush1.msra.mxu0 %v288
    %314 = vmatprep.subr.mxu0 0.0
    %315 = vmatpush1.msra.mxu0 %v289
    %316 = vmatprep.subr.mxu0 0.0
    %317 = vmatpush1.msra.mxu0 %v290
    %318 = vmatprep.subr.mxu0 0.0
    %319 = vmatpush1.msra.mxu0 %v291
    %320 = vmatprep.subr.mxu0 0.0
    %321 = vmatpush1.msra.mxu0 %v292
    %322 = vmatprep.subr.mxu0 0.0
    %323 = vmatpush1.msra.mxu0 %v293
    %324 = vmatprep.subr.mxu0 0.0
    %325 = vmatpush1.msra.mxu0 %v294
    %326 = vmatprep.subr.mxu0 0.0
    %327 = vmatpush1.msra.mxu0 %v295
    %328 = vmatprep.subr.mxu0 0.0
    %329 = vmatpush1.msra.mxu0 %v296
    %330 = vmatprep.subr.mxu0 0.0
    %331 = vmatpush1.msra.mxu0 %v297
    %332 = vmatprep.subr.mxu0 0.0
    %333 = vmatpush1.msra.mxu0 %v298
    %334 = vmatprep.subr.mxu0 0.0
    %335 = vmatpush1.msra.mxu0 %v299
    %336 = vmatprep.subr.mxu0 0.0
    %337 = vmatpush1.msra.mxu0 %v300
    %338 = vmatprep.subr.mxu0 0.0
    %339 = vmatpush1.msra.mxu0 %v301
    %340 = vmatprep.subr.mxu0 0.0
    %341 = vmatpush1.msra.mxu0 %v302
    %342 = vmatprep.subr.mxu0 0.0
    %343 = vmatpush1.msra.mxu0 0.0
    %344 = vmatprep.subr.mxu0 0.0
    %345 = vmatpush1.msra.mxu0 0.0
    %346 = vmatprep.subr.mxu0 0.0
    %347 = vmatpush1.msra.mxu0 0.0
    %348 = vmatprep.subr.mxu0 0.0
    %349 = vmatpush1.msra.mxu0 0.0
    %350 = vmatprep.subr.mxu0 0.0
    %351 = vmatpush1.msra.mxu0 0.0
    %352 = vmatprep.subr.mxu0 0.0
    %353 = vmatpush1.msra.mxu0 0.0
    %354 = vmatprep.subr.mxu0 0.0
    %355 = vmatpush1.msra.mxu0 0.0
    %356 = vmatprep.subr.mxu0 0.0
    %357 = vmatpush1.msra.mxu0 0.0
    %358 = vmatprep.subr.mxu0 0.0
    %359 = vmatpush1.msra.mxu0 0.0
    %360 = vmatprep.subr.mxu0 0.0
    %361 = vmatpush1.msra.mxu0 0.0
    %362 = vmatprep.subr.mxu0 0.0
    %363 = vmatpush1.msra.mxu0 0.0
    %364 = vmatprep.subr.mxu0 0.0
    %365 = vmatpush1.msra.mxu0 0.0
    %366 = vmatprep.subr.mxu0 0.0
    %367 = vmatpush1.msra.mxu0 0.0
    %368 = vmatprep.subr.mxu0 0.0
    %369 = vmatpush1.msra.mxu0 0.0
    %370 = vmatprep.subr.mxu0 0.0
    %371 = vmatpush1.msra.mxu0 0.0
    %372 = vmatprep.subr.mxu0 0.0
    %373 = vmatpush1.msra.mxu0 0.0
    %374 = vmatprep.mubr.f32.mxu0 0.0
    %375 = vmatmul.mubr.f32.gmra.mrb[0].mxu0 %v279
    %v376 = vpop.f32.mrb[0].mxu0
    %v377 = vadd.f32 %v308, %v376
    %v378 = vpop.f32.mrb[0].mxu0
    %379 = vmatprep.mubr.f32.mxu0 0.0
    %380 = vmatmul.mubr.f32.gmra.mrb[0].mxu0 %v280
    %v381 = vpop.f32.mrb[0].mxu0
    %v382 = vadd.f32 %v308, %v381
    %v383 = vpop.f32.mrb[0].mxu0
    %384 = vmatprep.mubr.f32.mxu0 0.0
    %385 = vmatmul.mubr.f32.gmra.mrb[0].mxu0 %v281
    %v386 = vpop.f32.mrb[0].mxu0
    %v387 = vadd.f32 %v308, %v386
    %v388 = vpop.f32.mrb[0].mxu0
    %389 = vmatprep.mubr.f32.mxu0 0.0
    %390 = vmatmul.mubr.f32.gmra.mrb[0].mxu0 %v282
    %v391 = vpop.f32.mrb[0].mxu0
    %v392 = vadd.f32 %v308, %v391
    %v393 = vpop.f32.mrb[0].mxu0
    %394 = vmatprep.mubr.f32.mxu0 0.0
    %395 = vmatmul.mubr.f32.gmra.mrb[0].mxu0 %v283
    %v396 = vpop.f32.mrb[0].mxu0
    %v397 = vadd.f32 %v308, %v396
    %v398 = vpop.f32.mrb[0].mxu0
    %399 = vmatprep.mubr.f32.mxu0 0.0
    %400 = vmatmul.mubr.f32.gmra.mrb[0].mxu0 %v284
    %v401 = vpop.f32.mrb[0].mxu0
    %v402 = vadd.f32 %v308, %v401
    %v403 = vpop.f32.mrb[0].mxu0
    %404 = vmatprep.mubr.f32.mxu0 0.0
    %405 = vmatmul.mubr.f32.gmra.mrb[0].mxu0 %v285
    %v406 = vpop.f32.mrb[0].mxu0
    %v407 = vadd.f32 %v308, %v406
    %v408 = vpop.f32.mrb[0].mxu0
    %409 = vmatprep.mubr.f32.mxu0 0.0
    %410 = vmatmul.mubr.f32.gmra.mrb[0].mxu0 %v286
    %v411 = vpop.f32.mrb[0].mxu0
    %v412 = vadd.f32 %v308, %v411
    %v413 = vpop.f32.mrb[0].mxu0
    %414 = vdwg.mxu0
    %v415 = vxor.u32 %v377, 2147483648
    %v416 = vxor.u32 %v382, 2147483648
    %v417 = vxor.u32 %v387, 2147483648
    %v418 = vxor.u32 %v392, 2147483648
    %v419 = vxor.u32 %v397, 2147483648
    %v420 = vxor.u32 %v402, 2147483648
    %v421 = vxor.u32 %v407, 2147483648
    %v422 = vxor.u32 %v412, 2147483648
    %v423 = vmul.f32 %v415, 1.442695
    %v424 = vpow.pop %v423
    %v425 = vmul.f32 %v416, 1.442695
    %v426 = vpow.pop %v425
    %v427 = vmul.f32 %v417, 1.442695
    %v428 = vpow.pop %v427
    %v429 = vmul.f32 %v418, 1.442695
    %v430 = vpow.pop %v429
    %v431 = vmul.f32 %v419, 1.442695
    %v432 = vpow.pop %v431
    %v433 = vmul.f32 %v420, 1.442695
    %v434 = vpow.pop %v433
    %v435 = vmul.f32 %v421, 1.442695
    %v436 = vpow.pop %v435
    %v437 = vmul.f32 %v422, 1.442695
    %v438 = vpow.pop %v437
    %v439 = vadd.f32 %v424, 1.0
    %v440 = vadd.f32 %v426, 1.0
    %v441 = vadd.f32 %v428, 1.0
    %v442 = vadd.f32 %v430, 1.0
    %v443 = vadd.f32 %v432, 1.0
    %v444 = vadd.f32 %v434, 1.0
    %v445 = vadd.f32 %v436, 1.0
    %v446 = vadd.f32 %v438, 1.0
    %v447 = vrcp.pop %v439
    %v448 = vmul.f32 1.0, %v447
    %v449 = vrcp.pop %v440
    %v450 = vmul.f32 1.0, %v449
    %v451 = vrcp.pop %v441
    %v452 = vmul.f32 1.0, %v451
    %v453 = vrcp.pop %v442
    %v454 = vmul.f32 1.0, %v453
    %v455 = vrcp.pop %v443
    %v456 = vmul.f32 1.0, %v455
    %v457 = vrcp.pop %v444
    %v458 = vmul.f32 1.0, %v457
    %v459 = vrcp.pop %v445
    %v460 = vmul.f32 1.0, %v459
    %v461 = vrcp.pop %v446
    %v462 = vmul.f32 1.0, %v461
    %v463 = vmul.f32 %v377, %v448
    %v464 = vmul.f32 %v382, %v450
    %v465 = vmul.f32 %v387, %v452
    %v466 = vmul.f32 %v392, %v454
    %v467 = vmul.f32 %v397, %v456
    %v468 = vmul.f32 %v402, %v458
    %v469 = vmul.f32 %v407, %v460
    %v470 = vmul.f32 %v412, %v462
    %v471 = vld [vmem:[%s6] sm:$0x1]
    %v473 = vlaneseq
    %v474 = vshrl.u32 %v473, 7
    %v475 = vsub.s32 0, %v474
    %v476 = vrot.slane %v471, %v475
    %v478 = vmul.f32 %v463, %v476
    %v479 = vmul.f32 %v464, %v476
    %v480 = vmul.f32 %v465, %v476
    %v481 = vmul.f32 %v466, %v476
    %v482 = vmul.f32 %v467, %v476
    %v483 = vmul.f32 %v468, %v476
    %v484 = vmul.f32 %v469, %v476
    %v485 = vmul.f32 %v470, %v476
    %486 = vadd.xlane.f32.xlu0 %v478
    %v487 = vpop.xlane.xlu0 %486
    %488 = vadd.xlane.f32.xlu0 %v479
    %v489 = vpop.xlane.xlu0 %488
    %490 = vadd.xlane.f32.xlu0 %v480
    %v491 = vpop.xlane.xlu0 %490
    %492 = vadd.xlane.f32.xlu0 %v481
    %v493 = vpop.xlane.xlu0 %492
    %494 = vadd.xlane.f32.xlu0 %v482
    %v495 = vpop.xlane.xlu0 %494
    %496 = vadd.xlane.f32.xlu0 %v483
    %v497 = vpop.xlane.xlu0 %496
    %498 = vadd.xlane.f32.xlu0 %v484
    %v499 = vpop.xlane.xlu0 %498
    %500 = vadd.xlane.f32.xlu0 %v485
    %v501 = vpop.xlane.xlu0 %500
    %v502 = vld [vmem:[#allocation2] sm:$0x1]
    %v504 = vlaneseq
    %v505 = vshrl.u32 %v504, 7
    %v506 = vsub.s32 0, %v505
    %v507 = vrot.slane %v502, %v506
    %v509 = vadd.f32 %v487, %v507
    %v510 = vadd.f32 %v489, %v507
    %v511 = vadd.f32 %v491, %v507
    %v512 = vadd.f32 %v493, %v507
    %v513 = vadd.f32 %v495, %v507
    %v514 = vadd.f32 %v497, %v507
    %v515 = vadd.f32 %v499, %v507
    %v516 = vadd.f32 %v501, %v507
    %vm517 = vcmask 7168
    %518 = vst.msk [vmem:[%s8] sm:$0xff] %vm517, %v509
    %519 = vst.msk [vmem:[%s8 + $0x8] sm:$0xff] %vm517, %v510
    %520 = vst.msk [vmem:[%s8 + $0x10] sm:$0xff] %vm517, %v511
    %521 = vst.msk [vmem:[%s8 + $0x18] sm:$0xff] %vm517, %v512
    %522 = vst.msk [vmem:[%s8 + $0x20] sm:$0xff] %vm517, %v513
    %523 = vst.msk [vmem:[%s8 + $0x28] sm:$0xff] %vm517, %v514
    %524 = vst.msk [vmem:[%s8 + $0x30] sm:$0xff] %vm517, %v515
    %525 = vst.msk [vmem:[%s8 + $0x38] sm:$0xff] %vm517, %v516
    %v526 = vlaneseq
    %v527 = vand.u32 %v526, 127
    %v528 = vld [vmem:[%s1] sm:$0xff]
    %v529 = vld [vmem:[%s1 + $0x8] sm:$0xff]
    %v530 = vld [vmem:[%s1 + $0x10] sm:$0xff]
    %v531 = vld [vmem:[%s1 + $0x18] sm:$0xff]
    %v532 = vld [vmem:[%s1 + $0x20] sm:$0xff]
    %v533 = vld [vmem:[%s1 + $0x28] sm:$0xff]
    %v534 = vld [vmem:[%s1 + $0x30] sm:$0xff]
    %v535 = vld [vmem:[%s1 + $0x38] sm:$0xff]
    %536 = vset.pattern.permute.xlu0 0
    %537 = vperm.xlu0 %536, %v528
    %v538 = vpop.permute.xlu0 %537
    %539 = vset.pattern.permute.xlu0 0
    %540 = vperm.xlu0 %539, %v529
    %v541 = vpop.permute.xlu0 %540
    %542 = vset.pattern.permute.xlu0 0
    %543 = vperm.xlu0 %542, %v530
    %v544 = vpop.permute.xlu0 %543
    %545 = vset.pattern.permute.xlu0 0
    %546 = vperm.xlu0 %545, %v531
    %v547 = vpop.permute.xlu0 %546
    %548 = vset.pattern.permute.xlu0 0
    %549 = vperm.xlu0 %548, %v532
    %v550 = vpop.permute.xlu0 %549
    %551 = vset.pattern.permute.xlu0 0
    %552 = vperm.xlu0 %551, %v533
    %v553 = vpop.permute.xlu0 %552
    %554 = vset.pattern.permute.xlu0 0
    %555 = vperm.xlu0 %554, %v534
    %v556 = vpop.permute.xlu0 %555
    %557 = vset.pattern.permute.xlu0 0
    %558 = vperm.xlu0 %557, %v535
    %v559 = vpop.permute.xlu0 %558
    %vm560 = vcmp.eq.s32.totalorder %v538, %v527
    %vm561 = vcmp.eq.s32.totalorder %v541, %v527
    %vm562 = vcmp.eq.s32.totalorder %v544, %v527
    %vm563 = vcmp.eq.s32.totalorder %v547, %v527
    %vm564 = vcmp.eq.s32.totalorder %v550, %v527
    %vm565 = vcmp.eq.s32.totalorder %v553, %v527
    %vm566 = vcmp.eq.s32.totalorder %v556, %v527
    %vm567 = vcmp.eq.s32.totalorder %v559, %v527
    %569 = vset.pattern.permute.xlu0 0
    %570 = vperm.xlu0 %569, %v509
    %v571 = vpop.permute.xlu0 %570
    %574 = vset.pattern.permute.xlu0 0
    %575 = vperm.xlu0 %574, %v510
    %v576 = vpop.permute.xlu0 %575
    %579 = vset.pattern.permute.xlu0 0
    %580 = vperm.xlu0 %579, %v511
    %v581 = vpop.permute.xlu0 %580
    %584 = vset.pattern.permute.xlu0 0
    %585 = vperm.xlu0 %584, %v512
    %v586 = vpop.permute.xlu0 %585
    %589 = vset.pattern.permute.xlu0 0
    %590 = vperm.xlu0 %589, %v513
    %v591 = vpop.permute.xlu0 %590
    %594 = vset.pattern.permute.xlu0 0
    %595 = vperm.xlu0 %594, %v514
    %v596 = vpop.permute.xlu0 %595
    %599 = vset.pattern.permute.xlu0 0
    %600 = vperm.xlu0 %599, %v515
    %v601 = vpop.permute.xlu0 %600
    %604 = vset.pattern.permute.xlu0 0
    %605 = vperm.xlu0 %604, %v516
    %v606 = vpop.permute.xlu0 %605
    %v608 = vsel %vm560, %v571, 0.0
    %v609 = vsel %vm561, %v576, 0.0
    %v610 = vsel %vm562, %v581, 0.0
    %v611 = vsel %vm563, %v586, 0.0
    %v612 = vsel %vm564, %v591, 0.0
    %v613 = vsel %vm565, %v596, 0.0
    %v614 = vsel %vm566, %v601, 0.0
    %v615 = vsel %vm567, %v606, 0.0
    %v616 = vadd.f32 %v608, %v609
    %v617 = vadd.f32 %v616, %v610
    %v618 = vadd.f32 %v617, %v611
    %v619 = vadd.f32 %v618, %v612
    %v620 = vadd.f32 %v619, %v613
    %v621 = vadd.f32 %v620, %v614
    %v622 = vadd.f32 %v621, %v615
    %v623 = vrot.slane %v622, 4
    %v624 = vadd.f32 %v622, %v623
    %v625 = vrot.slane %v624, 2
    %v626 = vadd.f32 %v624, %v625
    %v627 = vrot.slane %v626, 1
    %v628 = vadd.f32 %v626, %v627
    %629 = vst [vmem:[%s9] sm:$0x1] %v628
    // Predicated region
    $region72: #{mlp_efs_head_energy.1} parent=1 // pred_check
      _
    $region73: #{mlp_efs_head_energy.1} parent=1 // pred_check_branch
      %631 = sbr.rel (0) target = $region75
    $region74: #{mlp_efs_head_energy.1} parent=1 // pred_region
      _
    $region75: #{mlp_efs_head_energy.1} parent=1 // pred_fallthru
      _
    // Predicated region
    $region76: #{mlp_efs_head_energy.1} parent=1 // pred_check
      _
    $region77: #{mlp_efs_head_energy.1} parent=1 // pred_check_branch
      %633 = sbr.rel (0) target = $region79
    $region78: #{mlp_efs_head_energy.1} parent=1 // pred_region
      _
    $region79: #{mlp_efs_head_energy.1} parent=1 // pred_fallthru
      _
    // Predicated region
    $region80: #{mlp_efs_head_energy.1} parent=1 // pred_check
      _
    $region81: #{mlp_efs_head_energy.1} parent=1 // pred_check_branch
      %635 = sbr.rel (0) target = $region83
    $region82: #{mlp_efs_head_energy.1} parent=1 // pred_region
      _
    $region83: #{mlp_efs_head_energy.1} parent=1 // pred_fallthru
      _
    // Predicated region
    $region84: #{mlp_efs_head_energy.1} parent=1 // pred_check
      _
    $region85: #{mlp_efs_head_energy.1} parent=1 // pred_check_branch
      %637 = sbr.rel (0) target = $region87
    $region86: #{mlp_efs_head_energy.1} parent=1 // pred_region
      _
    $region87: #{mlp_efs_head_energy.1} parent=1 // pred_fallthru
      _

</llo_original>
